<compile_context>
chip_gen: v7x
topology: tpu7x:2x2x1
jax: 0.10.0
libtpu: 0.0.40
codegen_flags: <defaults>
</compile_context>

<pallas_src>
import jax
import jax.numpy as jnp
from jax import lax
from jax.experimental import pallas as pl
from jax.experimental.pallas import tpu as pltpu


def _round_up(a: int, m: int) -> int:
    return (a + m - 1) // m * m


def _vmem_limit_bytes() -> int:
    """~75% of this generation's physical VMEM, with a conservative fallback."""
    try:
        cap = int(pltpu.get_tpu_info().vmem_capacity_bytes)
        return int(min(cap * 3 // 4, 100 * 1024 * 1024))
    except Exception:
        return 48 * 1024 * 1024


def _choose_block_b(B: int, input_size: int, vmem_limit: int) -> int:
    """Batch tile: big (amortize per-step overhead), 128-multiple (MXU/lane
    density, lane-dense output blocks), >= 2 grid steps when B allows (v7x
    megacore), bounded so the double-buffered f32 x tile stays well under the
    VMEM budget."""
    if B <= 128:
        return max(8, _round_up(B, 8))          # single full-dim tile
    cap = (vmem_limit // 4) // (8 * max(input_size, 1))   # 2 bufs * 4 B
    cap = max(128, (cap // 128) * 128)
    return max(128, min(1024, cap, _round_up(pl.cdiv(B, 2), 128)))


def _make_mlp_kernel(no_of_layers: int, activation_function: str):
    """Pallas kernel for one batch tile of the fused MLP forward."""

    if activation_function == "tanh":
        act = jnp.tanh
    else:  # 'relu'
        act = lambda v: jnp.maximum(v, 0.0)

    def kernel(x_ref, *refs):
        # refs = (w1, b1, ..., wL, bL, w_out_col, b_out, o)
        o_ref = refs[-1]
        params = refs[:-1]

        # In-kernel bf16 cast (cheap VPU op, hidden under the matmuls). The
        # first layer contracts the last dims of both operands ('hi,bi->hb'),
        # which flips the activations to feature-major (H, TB): the big batch
        # dim sits on lanes for all following VPU / XLU / store work.
        xb = x_ref[...].astype(jnp.bfloat16)                 # (TB, in)
        w0 = params[0][...]                                  # (H, in) bf16
        b0 = params[1][...]                                  # (H, 1)  f32
        a = lax.dot_general(w0, xb, (((1,), (1,)), ((), ())),
                            preferred_element_type=jnp.float32) + b0
        h = act(a).astype(jnp.bfloat16)                      # (H, TB) bf16

        for i in range(1, no_of_layers):
            w = params[2 * i][...]                           # (H, H) bf16
            b = params[2 * i + 1][...]                       # (H, 1) f32
            a = jnp.dot(w, h, preferred_element_type=jnp.float32) + b
            h = act(a).astype(jnp.bfloat16)

        # Output layer (H -> 1): f32 VPU multiply + sublane reduce (XLU).
        # Result is already a lane-dense (1, TB) row -- no broadcast, no
        # write amplification.
        w_out = params[2 * no_of_layers][...]                # (H, 1) f32
        b_out = params[2 * no_of_layers + 1][...]            # (1, 1) f32
        logit = jnp.sum(h.astype(jnp.float32) * w_out,
                        axis=0, keepdims=True) + b_out       # (1, TB)

        # Sigmoid: exp + approximate reciprocal, both on the EUP slot.
        o_ref[...] = pl.reciprocal(1.0 + jnp.exp(-logit),
                                   approx=True).astype(o_ref.dtype)

    return kernel


def mlp_forward(x, params, *, no_of_layers, activation_function,
                block_b=None, single_buffer_params=True):
    """Forward pass.

    x: (B, input_size) float array (passed as-is; cast to bf16 in-kernel).
    params: flat list [w1, b1, ..., wL, bL, w_out, b_out] in PyTorch layout:
            weights (out_features, in_features), biases (out_features,).
    Returns (B, 1) float32, matching sigmoid(Linear(...act(Linear(x))...)).
    """
    B, input_size = x.shape
    hidden = params[0].shape[0]

    vmem_limit = _vmem_limit_bytes()
    if block_b is None:
        block_b = _choose_block_b(B, input_size, vmem_limit)
    block_b = max(8, _round_up(int(block_b), 8))
    if pl.cdiv(B, block_b) > 1 and block_b % 128 != 0:
        # Lane-dense (1, block_b) output blocks need a 128-multiple width when
        # the grid has >1 step (also keeps MXU passes full on v5e).
        block_b = _round_up(block_b, 128)
    grid_b = pl.cdiv(B, block_b)
    b_pad = grid_b * block_b

    # Kernel-side parameter packing (feature-major): hidden weights keep the
    # PyTorch (out, in) orientation as bf16, biases become (H, 1) f32 columns,
    # and the final (1, H) weight becomes an (H, 1) f32 column for the VPU
    # multiply + sublane reduction.
    kparams = []
    for i in range(no_of_layers):
        kparams.append(params[2 * i].astype(jnp.bfloat16))
        kparams.append(params[2 * i + 1].reshape(-1, 1).astype(jnp.float32))
    kparams.append(params[2 * no_of_layers].reshape(-1, 1).astype(jnp.float32))
    kparams.append(params[2 * no_of_layers + 1].reshape(1, 1).astype(jnp.float32))

    kernel = _make_mlp_kernel(no_of_layers, activation_function)

    in_specs = [pl.BlockSpec((block_b, input_size), lambda i: (i, 0))]
    for p in kparams:
        if single_buffer_params:
            # Constant index_map -> VMEM-resident; nothing to pipeline, so a
            # single buffer halves the resident-parameter VMEM footprint.
            spec = pl.BlockSpec(p.shape, lambda i: (0, 0),
                                pipeline_mode=pl.Buffered(1))
        else:
            spec = pl.BlockSpec(p.shape, lambda i: (0, 0))
        in_specs.append(spec)

    # Transposed, lane-dense output: one (1, block_b) row per grid step.
    out_specs = pl.BlockSpec((1, block_b), lambda i: (0, i))
    out_shape = jax.ShapeDtypeStruct((1, b_pad), jnp.float32)

    flops = 2 * B * (input_size * hidden
                     + max(no_of_layers - 1, 0) * hidden * hidden
                     + hidden)
    trans = 2 * B + (B * no_of_layers * hidden
                     if activation_function == "tanh" else 0)
    bytes_accessed = (int(x.size) * x.dtype.itemsize
                      + sum(int(p.size) * p.dtype.itemsize for p in kparams)
                      + b_pad * 4)
    cost = pl.CostEstimate(flops=int(flops), transcendentals=int(trans),
                           bytes_accessed=int(bytes_accessed))

    out = pl.pallas_call(
        kernel,
        out_shape=out_shape,
        grid=(grid_b,),
        in_specs=in_specs,
        out_specs=out_specs,
        compiler_params=pltpu.CompilerParams(
            dimension_semantics=("parallel",),   # megacore batch sharding
            vmem_limit_bytes=vmem_limit,
        ),
        cost_estimate=cost,
    )(x, *kparams)

    return out[0, :B].reshape(B, 1)


def init_params(key, input_size, no_of_layers, hidden_size, activation_function):
    """Deterministic init mimicking the PyTorch module's __init__ (weights in
    the PyTorch (out_features, in_features) layout; the module re-inits every
    linear layer with kaiming/xavier, biases keep nn.Linear's default
    uniform(-1/sqrt(fan_in), 1/sqrt(fan_in)))."""
    dims = [input_size] + [hidden_size] * no_of_layers + [1]
    params = []
    for i in range(len(dims) - 1):
        fan_in, fan_out = dims[i], dims[i + 1]
        key, wk, bk = jax.random.split(key, 3)
        if activation_function == "relu":
            wb = float(jnp.sqrt(6.0 / fan_in))                 # kaiming_uniform_
        else:
            wb = float(jnp.sqrt(6.0 / (fan_in + fan_out)))     # xavier_uniform_
        w = jax.random.uniform(wk, (fan_out, fan_in), jnp.float32, -wb, wb)
        bbound = 1.0 / float(jnp.sqrt(fan_in))
        b = jax.random.uniform(bk, (fan_out,), jnp.float32, -bbound, bbound)
        params.append(w)
        params.append(b)
    return params


def _reference(x, params, no_of_layers, activation_function):
    h = x
    for i in range(no_of_layers):
        a = h @ params[2 * i].T + params[2 * i + 1]
        h = jnp.maximum(a, 0.0) if activation_function == "relu" else jnp.tanh(a)
    logits = h @ params[2 * no_of_layers].T + params[2 * no_of_layers + 1]
    return jax.nn.sigmoid(logits)


if __name__ == "__main__":
    input_size = 32
    hidden_size = 32
    no_of_layers = 2

    base_key = jax.random.PRNGKey(0)

    def run_all(single_buffer_params):
        key = base_key
        for activation_function in ("relu", "tanh"):
            key, pk = jax.random.split(key)
            params = init_params(pk, input_size, no_of_layers, hidden_size,
                                 activation_function)
            # batch=20 -> single full-dim tile; batch=200 -> 2-step "parallel"
            # grid with a ragged last block (exercises boundary padding).
            for batch in (20, 200):
                key, xk = jax.random.split(key)
                x = jax.random.normal(xk, (batch, input_size), jnp.float32)
                out = jax.block_until_ready(
                    mlp_forward(x, params,
                                no_of_layers=no_of_layers,
                                activation_function=activation_function,
                                single_buffer_params=single_buffer_params))
                assert out.shape == (batch, 1)
                ref = _reference(x, params, no_of_layers, activation_function)
                # bf16 matmuls + approx reciprocal -> loose tolerance vs f32;
                # error grows with depth/width (fine at these small shapes).
                assert jnp.allclose(out, ref, atol=2e-2), (
                    f"mismatch vs reference ({activation_function}, B={batch})")

    try:
        run_all(True)
    except Exception:
        # TODO(synk): pl.Buffered(1) single-buffered resident params not
        # accepted by this jax build; rerun with default double buffering.
        run_all(False)

    print("KERNEL_OK")
</pallas_src>

<mosaic_0001>
module attributes {stable_mosaic.version = 11 : i64} {
  func.func @kernel(%arg0: i32, %arg1: memref<24x32xf32, #tpu.memory_space<vmem>>, %arg2: memref<32x32xbf16, #tpu.memory_space<vmem>>, %arg3: memref<32x1xf32, #tpu.memory_space<vmem>>, %arg4: memref<32x32xbf16, #tpu.memory_space<vmem>>, %arg5: memref<32x1xf32, #tpu.memory_space<vmem>>, %arg6: memref<32x1xf32, #tpu.memory_space<vmem>>, %arg7: memref<1x1xf32, #tpu.memory_space<vmem>>, %arg8: memref<1x24xf32, #tpu.memory_space<vmem>>) attributes {dimension_semantics = [#tpu.dimension_semantics<parallel>], iteration_bounds = array<i64: 1>, scalar_prefetch = 0 : i64, scratch_operands = 0 : i64, tpu.core_type = #tpu.core_type<tc>, window_params = [{transform_indices = @transform_0, window_bounds = array<i64: 24, 32>}, {pipeline_mode = #tpu.pipeline_mode<synchronous>, transform_indices = @transform_1, window_bounds = array<i64: 32, 32>}, {pipeline_mode = #tpu.pipeline_mode<synchronous>, transform_indices = @transform_2, window_bounds = array<i64: 32, 1>}, {pipeline_mode = #tpu.pipeline_mode<synchronous>, transform_indices = @transform_3, window_bounds = array<i64: 32, 32>}, {pipeline_mode = #tpu.pipeline_mode<synchronous>, transform_indices = @transform_4, window_bounds = array<i64: 32, 1>}, {pipeline_mode = #tpu.pipeline_mode<synchronous>, transform_indices = @transform_5, window_bounds = array<i64: 32, 1>}, {pipeline_mode = #tpu.pipeline_mode<synchronous>, transform_indices = @transform_6, window_bounds = array<i64: 1, 1>}, {transform_indices = @transform_7, window_bounds = array<i64: 1, 24>}]} {
    %c0 = arith.constant 0 : index
    %c0_0 = arith.constant 0 : index
    %0 = vector.load %arg1[%c0, %c0_0] : memref<24x32xf32, #tpu.memory_space<vmem>>, vector<24x32xf32>
    %1 = arith.truncf %0 : vector<24x32xf32> to vector<24x32xbf16>
    %c0_1 = arith.constant 0 : index
    %c0_2 = arith.constant 0 : index
    %2 = vector.load %arg2[%c0_1, %c0_2] : memref<32x32xbf16, #tpu.memory_space<vmem>>, vector<32x32xbf16>
    %c0_3 = arith.constant 0 : index
    %c0_4 = arith.constant 0 : index
    %3 = vector.load %arg3[%c0_3, %c0_4] : memref<32x1xf32, #tpu.memory_space<vmem>>, vector<32x1xf32>
    %cst = arith.constant dense<0.000000e+00> : vector<32x24xf32>
    %4 = tpu.matmul %2, %1, %cst {dimension_numbers = #tpu.dot_dimension_numbers<[1], [1], [0], [0], [0, 0, 1, 0], [], []>} : vector<32x32xbf16>, vector<24x32xbf16>, vector<32x24xf32> -> vector<32x24xf32>
    %5 = vector.broadcast %3 : vector<32x1xf32> to vector<32x24xf32>
    %6 = arith.addf %4, %5 : vector<32x24xf32>
    %cst_5 = arith.constant 0.000000e+00 : f32
    %7 = vector.broadcast %cst_5 : f32 to vector<32x24xf32>
    %8 = arith.maximumf %6, %7 : vector<32x24xf32>
    %9 = arith.truncf %8 : vector<32x24xf32> to vector<32x24xbf16>
    %c0_6 = arith.constant 0 : index
    %c0_7 = arith.constant 0 : index
    %10 = vector.load %arg4[%c0_6, %c0_7] : memref<32x32xbf16, #tpu.memory_space<vmem>>, vector<32x32xbf16>
    %c0_8 = arith.constant 0 : index
    %c0_9 = arith.constant 0 : index
    %11 = vector.load %arg5[%c0_8, %c0_9] : memref<32x1xf32, #tpu.memory_space<vmem>>, vector<32x1xf32>
    %cst_10 = arith.constant dense<0.000000e+00> : vector<32x24xf32>
    %12 = tpu.matmul %10, %9, %cst_10 {dimension_numbers = #tpu.dot_dimension_numbers<[1], [0], [0], [1], [0, 0, 1, 1], [], []>} : vector<32x32xbf16>, vector<32x24xbf16>, vector<32x24xf32> -> vector<32x24xf32>
    %13 = vector.broadcast %11 : vector<32x1xf32> to vector<32x24xf32>
    %14 = arith.addf %12, %13 : vector<32x24xf32>
    %cst_11 = arith.constant 0.000000e+00 : f32
    %15 = vector.broadcast %cst_11 : f32 to vector<32x24xf32>
    %16 = arith.maximumf %14, %15 : vector<32x24xf32>
    %17 = arith.truncf %16 : vector<32x24xf32> to vector<32x24xbf16>
    %c0_12 = arith.constant 0 : index
    %c0_13 = arith.constant 0 : index
    %18 = vector.load %arg6[%c0_12, %c0_13] : memref<32x1xf32, #tpu.memory_space<vmem>>, vector<32x1xf32>
    %c0_14 = arith.constant 0 : index
    %c0_15 = arith.constant 0 : index
    %19 = vector.load %arg7[%c0_14, %c0_15] : memref<1x1xf32, #tpu.memory_space<vmem>>, vector<1x1xf32>
    %20 = arith.extf %17 : vector<32x24xbf16> to vector<32x24xf32>
    %21 = vector.broadcast %18 : vector<32x1xf32> to vector<32x24xf32>
    %22 = arith.mulf %20, %21 : vector<32x24xf32>
    %cst_16 = arith.constant dense<0.000000e+00> : vector<24xf32>
    %23 = vector.multi_reduction <add>, %22, %cst_16 [0] : vector<32x24xf32> to vector<24xf32>
    %24 = vector.shape_cast %23 : vector<24xf32> to vector<1x24xf32>
    %25 = vector.broadcast %19 : vector<1x1xf32> to vector<1x24xf32>
    %26 = arith.addf %24, %25 : vector<1x24xf32>
    %cst_17 = arith.constant 0.000000e+00 : f32
    %27 = vector.broadcast %cst_17 : f32 to vector<1x24xf32>
    %28 = arith.subf %27, %26 : vector<1x24xf32>
    %29 = math.exp %28 : vector<1x24xf32>
    %cst_18 = arith.constant 1.000000e+00 : f32
    %30 = vector.broadcast %cst_18 : f32 to vector<1x24xf32>
    %31 = arith.addf %30, %29 : vector<1x24xf32>
    %32 = tpu.reciprocal %31 {approx = true} : vector<1x24xf32> -> vector<1x24xf32>
    %c0_19 = arith.constant 0 : index
    %c0_20 = arith.constant 0 : index
    %33 = vector.load %arg8[%c0_19, %c0_20] : memref<1x24xf32, #tpu.memory_space<vmem>>, vector<1x24xf32>
    tpu.vector_store %arg8[%c0_19, %c0_20], %32 {strides = array<i32>} : memref<1x24xf32, #tpu.memory_space<vmem>>, vector<1x24xf32>,
    return
  }
  func.func @transform_0(%arg0: i32) -> (i32, i32) {
    %c0_i32 = arith.constant 0 : i32
    %c0_i32_0 = arith.constant 0 : i32
    return %arg0, %c0_i32 : i32, i32
  }
  func.func @transform_1(%arg0: i32) -> (i32, i32) {
    %c0_i32 = arith.constant 0 : i32
    %c0_i32_0 = arith.constant 0 : i32
    %c0_i32_1 = arith.constant 0 : i32
    return %c0_i32, %c0_i32_0 : i32, i32
  }
  func.func @transform_2(%arg0: i32) -> (i32, i32) {
    %c0_i32 = arith.constant 0 : i32
    %c0_i32_0 = arith.constant 0 : i32
    %c0_i32_1 = arith.constant 0 : i32
    return %c0_i32, %c0_i32_0 : i32, i32
  }
  func.func @transform_3(%arg0: i32) -> (i32, i32) {
    %c0_i32 = arith.constant 0 : i32
    %c0_i32_0 = arith.constant 0 : i32
    %c0_i32_1 = arith.constant 0 : i32
    return %c0_i32, %c0_i32_0 : i32, i32
  }
  func.func @transform_4(%arg0: i32) -> (i32, i32) {
    %c0_i32 = arith.constant 0 : i32
    %c0_i32_0 = arith.constant 0 : i32
    %c0_i32_1 = arith.constant 0 : i32
    return %c0_i32, %c0_i32_0 : i32, i32
  }
  func.func @transform_5(%arg0: i32) -> (i32, i32) {
    %c0_i32 = arith.constant 0 : i32
    %c0_i32_0 = arith.constant 0 : i32
    %c0_i32_1 = arith.constant 0 : i32
    return %c0_i32, %c0_i32_0 : i32, i32
  }
  func.func @transform_6(%arg0: i32) -> (i32, i32) {
    %c0_i32 = arith.constant 0 : i32
    %c0_i32_0 = arith.constant 0 : i32
    %c0_i32_1 = arith.constant 0 : i32
    return %c0_i32, %c0_i32_0 : i32, i32
  }
  func.func @transform_7(%arg0: i32) -> (i32, i32) {
    %c0_i32 = arith.constant 0 : i32
    %c0_i32_0 = arith.constant 0 : i32
    return %c0_i32, %arg0 : i32, i32
  }
}

module attributes {stable_mosaic.version = 11 : i64} {
  func.func @kernel(%arg0: i32, %arg1: memref<24x32xf32, #tpu.memory_space<vmem>>, %arg2: memref<32x32xbf16, #tpu.memory_space<vmem>>, %arg3: memref<32x1xf32, #tpu.memory_space<vmem>>, %arg4: memref<32x32xbf16, #tpu.memory_space<vmem>>, %arg5: memref<32x1xf32, #tpu.memory_space<vmem>>, %arg6: memref<32x1xf32, #tpu.memory_space<vmem>>, %arg7: memref<1x1xf32, #tpu.memory_space<vmem>>, %arg8: memref<1x24xf32, #tpu.memory_space<vmem>>) attributes {dimension_semantics = [#tpu.dimension_semantics<parallel>], iteration_bounds = array<i64: 1>, scalar_prefetch = 0 : i64, scratch_operands = 0 : i64, tpu.core_type = #tpu.core_type<tc>, window_params = [{transform_indices = @transform_0, window_bounds = array<i64: 24, 32>}, {pipeline_mode = #tpu.pipeline_mode<synchronous>, transform_indices = @transform_1, window_bounds = array<i64: 32, 32>}, {pipeline_mode = #tpu.pipeline_mode<synchronous>, transform_indices = @transform_2, window_bounds = array<i64: 32, 1>}, {pipeline_mode = #tpu.pipeline_mode<synchronous>, transform_indices = @transform_3, window_bounds = array<i64: 32, 32>}, {pipeline_mode = #tpu.pipeline_mode<synchronous>, transform_indices = @transform_4, window_bounds = array<i64: 32, 1>}, {pipeline_mode = #tpu.pipeline_mode<synchronous>, transform_indices = @transform_5, window_bounds = array<i64: 32, 1>}, {pipeline_mode = #tpu.pipeline_mode<synchronous>, transform_indices = @transform_6, window_bounds = array<i64: 1, 1>}, {transform_indices = @transform_7, window_bounds = array<i64: 1, 24>}]} {
    %c0 = arith.constant 0 : index
    %c0_0 = arith.constant 0 : index
    %0 = vector.load %arg1[%c0, %c0_0] : memref<24x32xf32, #tpu.memory_space<vmem>>, vector<24x32xf32>
    %1 = arith.truncf %0 : vector<24x32xf32> to vector<24x32xbf16>
    %c0_1 = arith.constant 0 : index
    %c0_2 = arith.constant 0 : index
    %2 = vector.load %arg2[%c0_1, %c0_2] : memref<32x32xbf16, #tpu.memory_space<vmem>>, vector<32x32xbf16>
    %c0_3 = arith.constant 0 : index
    %c0_4 = arith.constant 0 : index
    %3 = vector.load %arg3[%c0_3, %c0_4] : memref<32x1xf32, #tpu.memory_space<vmem>>, vector<32x1xf32>
    %cst = arith.constant dense<0.000000e+00> : vector<32x24xf32>
    %4 = tpu.matmul %2, %1, %cst {dimension_numbers = #tpu.dot_dimension_numbers<[1], [1], [0], [0], [0, 0, 1, 0], [], []>} : vector<32x32xbf16>, vector<24x32xbf16>, vector<32x24xf32> -> vector<32x24xf32>
    %5 = vector.broadcast %3 : vector<32x1xf32> to vector<32x24xf32>
    %6 = arith.addf %4, %5 : vector<32x24xf32>
    %cst_5 = arith.constant 0.000000e+00 : f32
    %7 = vector.broadcast %cst_5 : f32 to vector<32x24xf32>
    %8 = arith.maximumf %6, %7 : vector<32x24xf32>
    %9 = arith.truncf %8 : vector<32x24xf32> to vector<32x24xbf16>
    %c0_6 = arith.constant 0 : index
    %c0_7 = arith.constant 0 : index
    %10 = vector.load %arg4[%c0_6, %c0_7] : memref<32x32xbf16, #tpu.memory_space<vmem>>, vector<32x32xbf16>
    %c0_8 = arith.constant 0 : index
    %c0_9 = arith.constant 0 : index
    %11 = vector.load %arg5[%c0_8, %c0_9] : memref<32x1xf32, #tpu.memory_space<vmem>>, vector<32x1xf32>
    %cst_10 = arith.constant dense<0.000000e+00> : vector<32x24xf32>
    %12 = tpu.matmul %10, %9, %cst_10 {dimension_numbers = #tpu.dot_dimension_numbers<[1], [0], [0], [1], [0, 0, 1, 1], [], []>} : vector<32x32xbf16>, vector<32x24xbf16>, vector<32x24xf32> -> vector<32x24xf32>
    %13 = vector.broadcast %11 : vector<32x1xf32> to vector<32x24xf32>
    %14 = arith.addf %12, %13 : vector<32x24xf32>
    %cst_11 = arith.constant 0.000000e+00 : f32
    %15 = vector.broadcast %cst_11 : f32 to vector<32x24xf32>
    %16 = arith.maximumf %14, %15 : vector<32x24xf32>
    %17 = arith.truncf %16 : vector<32x24xf32> to vector<32x24xbf16>
    %c0_12 = arith.constant 0 : index
    %c0_13 = arith.constant 0 : index
    %18 = vector.load %arg6[%c0_12, %c0_13] : memref<32x1xf32, #tpu.memory_space<vmem>>, vector<32x1xf32>
    %c0_14 = arith.constant 0 : index
    %c0_15 = arith.constant 0 : index
    %19 = vector.load %arg7[%c0_14, %c0_15] : memref<1x1xf32, #tpu.memory_space<vmem>>, vector<1x1xf32>
    %20 = arith.extf %17 : vector<32x24xbf16> to vector<32x24xf32>
    %21 = vector.broadcast %18 : vector<32x1xf32> to vector<32x24xf32>
    %22 = arith.mulf %20, %21 : vector<32x24xf32>
    %cst_16 = arith.constant dense<0.000000e+00> : vector<24xf32>
    %23 = vector.multi_reduction <add>, %22, %cst_16 [0] : vector<32x24xf32> to vector<24xf32>
    %24 = vector.shape_cast %23 : vector<24xf32> to vector<1x24xf32>
    %25 = vector.broadcast %19 : vector<1x1xf32> to vector<1x24xf32>
    %26 = arith.addf %24, %25 : vector<1x24xf32>
    %cst_17 = arith.constant 0.000000e+00 : f32
    %27 = vector.broadcast %cst_17 : f32 to vector<1x24xf32>
    %28 = arith.subf %27, %26 : vector<1x24xf32>
    %29 = math.exp %28 : vector<1x24xf32>
    %cst_18 = arith.constant 1.000000e+00 : f32
    %30 = vector.broadcast %cst_18 : f32 to vector<1x24xf32>
    %31 = arith.addf %30, %29 : vector<1x24xf32>
    %32 = tpu.reciprocal %31 {approx = true} : vector<1x24xf32> -> vector<1x24xf32>
    %c0_19 = arith.constant 0 : index
    %c0_20 = arith.constant 0 : index
    %33 = vector.load %arg8[%c0_19, %c0_20] : memref<1x24xf32, #tpu.memory_space<vmem>>, vector<1x24xf32>
    tpu.vector_store %arg8[%c0_19, %c0_20], %32 {strides = array<i32>} : memref<1x24xf32, #tpu.memory_space<vmem>>, vector<1x24xf32>,
    return
  }
  func.func @transform_0(%arg0: i32) -> (i32, i32) {
    %c0_i32 = arith.constant 0 : i32
    %c0_i32_0 = arith.constant 0 : i32
    return %arg0, %c0_i32 : i32, i32
  }
  func.func @transform_1(%arg0: i32) -> (i32, i32) {
    %c0_i32 = arith.constant 0 : i32
    %c0_i32_0 = arith.constant 0 : i32
    %c0_i32_1 = arith.constant 0 : i32
    return %c0_i32, %c0_i32_0 : i32, i32
  }
  func.func @transform_2(%arg0: i32) -> (i32, i32) {
    %c0_i32 = arith.constant 0 : i32
    %c0_i32_0 = arith.constant 0 : i32
    %c0_i32_1 = arith.constant 0 : i32
    return %c0_i32, %c0_i32_0 : i32, i32
  }
  func.func @transform_3(%arg0: i32) -> (i32, i32) {
    %c0_i32 = arith.constant 0 : i32
    %c0_i32_0 = arith.constant 0 : i32
    %c0_i32_1 = arith.constant 0 : i32
    return %c0_i32, %c0_i32_0 : i32, i32
  }
  func.func @transform_4(%arg0: i32) -> (i32, i32) {
    %c0_i32 = arith.constant 0 : i32
    %c0_i32_0 = arith.constant 0 : i32
    %c0_i32_1 = arith.constant 0 : i32
    return %c0_i32, %c0_i32_0 : i32, i32
  }
  func.func @transform_5(%arg0: i32) -> (i32, i32) {
    %c0_i32 = arith.constant 0 : i32
    %c0_i32_0 = arith.constant 0 : i32
    %c0_i32_1 = arith.constant 0 : i32
    return %c0_i32, %c0_i32_0 : i32, i32
  }
  func.func @transform_6(%arg0: i32) -> (i32, i32) {
    %c0_i32 = arith.constant 0 : i32
    %c0_i32_0 = arith.constant 0 : i32
    %c0_i32_1 = arith.constant 0 : i32
    return %c0_i32, %c0_i32_0 : i32, i32
  }
  func.func @transform_7(%arg0: i32) -> (i32, i32) {
    %c0_i32 = arith.constant 0 : i32
    %c0_i32_0 = arith.constant 0 : i32
    return %c0_i32, %arg0 : i32, i32
  }
}

</mosaic_0001>

<llo_original>
// kernel: tpu_custom_call.1
$region0: #{tpu_custom_call.1}
  #allocation0 [shape = 'u32[]', space=smem, size = 0x4, offset = 0x4, fixed_abs, tag = 'smem constant byte address 0x4 - core index']
  #allocation1 [shape = 'u32[144,128]{1,0:T(1,128)}', space=vmem, size = 0x12000, scoped, tag = 'internal scratch']
  #allocation2 [shape = 'f32[1,1]{1,0:T(1,128)S(1)}', space=vmem, size = 0x200, scoped, tag = 'scoped memory for tpu_custom_call.1']
  %s0 = inlined_call_operand.vmem [shape: f32[20,32], index: 0, kind: input, shape index: {}]
  %s1 = inlined_call_operand.vmem [shape: bf16[32,32], index: 1, kind: input, shape index: {}]
  %s2 = inlined_call_operand.vmem [shape: f32[32,1], index: 2, kind: input, shape index: {}]
  %s3 = inlined_call_operand.vmem [shape: bf16[32,32], index: 3, kind: input, shape index: {}]
  %s4 = inlined_call_operand.vmem [shape: f32[32,1], index: 4, kind: input, shape index: {}]
  %s5 = inlined_call_operand.vmem [shape: f32[32,1], index: 5, kind: input, shape index: {}]
  %s6 = inlined_call_operand.<no memory space> [shape: f32[1,1], index: 6, kind: input, shape index: {}]
  %s7 = inlined_call_operand.hbm [shape: f32[1,24], index: 7, kind: output, shape index: {}]
  %s8 = sld [smem:[#allocation0]]
  $region38: #{tpu_custom_call.1} parent=0
    _
  %s10 = ssub.s32 1, %s8
  %s11 = scalar_select 0, %s10, %s8
  %v12 = vstv %s6
  %13 = vst [vmem:[#allocation2] sm:$0x1] %v12
  $region1: #{tpu_custom_call.1} parent=0
    #allocation3 [shape = 'u8[512]{0}', space=vmem, size = 0x400, scoped, tag = 'output window, operand 0, single buffered']
    #allocation4 [shape = 's32[1]{0}', space=sflag, size = 0x4, scoped, tag = 'scoped memory for tpu_custom_call.1']
    %14 = vsyncpa [#allocation4], 0
    // Predicated region
    $region2: #{tpu_custom_call.1} parent=1 // pred_check
      _
    $region3: #{tpu_custom_call.1} parent=1 // pred_check_branch
      %16 = sbr.rel (0) target = $region5
    $region4: #{tpu_custom_call.1} parent=1 // pred_region
      _
    $region5: #{tpu_custom_call.1} parent=1 // pred_fallthru
      _
    // Predicated region
    $region6: #{tpu_custom_call.1} parent=1 // pred_check
      _
    $region7: #{tpu_custom_call.1} parent=1 // pred_check_branch
      %18 = sbr.rel (0) target = $region9
    $region8: #{tpu_custom_call.1} parent=1 // pred_region
      _
    $region9: #{tpu_custom_call.1} parent=1 // pred_fallthru
      _
    // Predicated region
    $region10: #{tpu_custom_call.1} parent=1 // pred_check
      _
    $region11: #{tpu_custom_call.1} parent=1 // pred_check_branch
      %20 = sbr.rel (0) target = $region13
    $region12: #{tpu_custom_call.1} parent=1 // pred_region
      _
    $region13: #{tpu_custom_call.1} parent=1 // pred_fallthru
      _
    // Predicated region
    $region14: #{tpu_custom_call.1} parent=1 // pred_check
      _
    $region15: #{tpu_custom_call.1} parent=1 // pred_check_branch
      %22 = sbr.rel (0) target = $region17
    $region16: #{tpu_custom_call.1} parent=1 // pred_region
      _
    $region17: #{tpu_custom_call.1} parent=1 // pred_fallthru
      _
    // Predicated region
    $region18: #{tpu_custom_call.1} parent=1 // pred_check
      _
    $region19: #{tpu_custom_call.1} parent=1 // pred_check_branch
      %24 = sbr.rel (0) target = $region21
    $region20: #{tpu_custom_call.1} parent=1 // pred_region
      _
    $region21: #{tpu_custom_call.1} parent=1 // pred_fallthru
      _
    // Predicated region
    $region22: #{tpu_custom_call.1} parent=1 // pred_check
      _
    $region23: #{tpu_custom_call.1} parent=1 // pred_check_branch
      %26 = sbr.rel (0) target = $region25
    $region24: #{tpu_custom_call.1} parent=1 // pred_region
      _
    $region25: #{tpu_custom_call.1} parent=1 // pred_fallthru
      _
    // Predicated region
    $region26: #{tpu_custom_call.1} parent=1 // pred_check
      _
    $region27: #{tpu_custom_call.1} parent=1 // pred_check_branch
      %28 = sbr.rel (0) target = $region29
    $region28: #{tpu_custom_call.1} parent=1 // pred_region
      _
    $region29: #{tpu_custom_call.1} parent=1 // pred_fallthru
      _
    %v30 = vld [vmem:[%s0] sm:$0xff]
    %v31 = vld [vmem:[%s0 + $0x8] sm:$0xff]
    %v32 = vld [vmem:[%s0 + $0x10] sm:$0xff]
    %v33 = vpack.c.bf16 %v31, %v30
    %v34 = vpack.c.bf16 %v32, %v32
    %v35 = vld [vmem:[%s1] sm:$0xf]
    %v36 = vld [vmem:[%s1 + $0x4] sm:$0xf]
    %v37 = vld [vmem:[%s1 + $0x8] sm:$0xf]
    %v38 = vld [vmem:[%s1 + $0xc] sm:$0xf]
    %v39 = vld [vmem:[%s2] sm:$0xff]
    %v40 = vld [vmem:[%s2 + $0x8] sm:$0xff]
    %v41 = vld [vmem:[%s2 + $0x10] sm:$0xff]
    %v42 = vld [vmem:[%s2 + $0x18] sm:$0xff]
    %44 = vset.pattern.permute.xlu0 0
    %45 = vperm.xlu0 %44, %v39
    %v46 = vpop.permute.xlu0 %45
    %49 = vset.pattern.permute.xlu0 0
    %50 = vperm.xlu0 %49, %v40
    %v51 = vpop.permute.xlu0 %50
    %54 = vset.pattern.permute.xlu0 0
    %55 = vperm.xlu0 %54, %v41
    %v56 = vpop.permute.xlu0 %55
    %59 = vset.pattern.permute.xlu0 0
    %60 = vperm.xlu0 %59, %v42
    %v61 = vpop.permute.xlu0 %60
    %v67 = vunpack.c.l.b16 %v35
    %v68 = vunpack.c.l.b16 %v36
    %v69 = vunpack.c.l.b16 %v37
    %v70 = vunpack.c.l.b16 %v38
    %v71 = vpack.c.b16 %v68, %v67
    %v72 = vpack.c.b16 %v70, %v69
    %vm73 = vcmask 261120
    %v75 = vsel %vm73, %v71, 0
    %v78 = vsel %vm73, %v72, 0
    %v81 = vsel %vm73, %v33, 0
    %v84 = vsel %vm73, %v34, 0
    %86 = vmatprep.subr.bf16.mxu0 0
    %87 = vmatpush1.bf16.xpose.msra.mxu0 %v81
    %88 = vmatprep.subr.bf16.mxu0 0
    %89 = vmatpush1.bf16.xpose.msra.mxu0 %v84
    %90 = vmatprep.subr.bf16.mxu0 0
    %91 = vmatpush1.bf16.xpose.msra.mxu0 0
    %92 = vmatprep.subr.bf16.mxu0 0
    %93 = vmatpush1.bf16.xpose.msra.mxu0 0
    %94 = vmatprep.subr.bf16.mxu0 0
    %95 = vmatpush1.bf16.xpose.msra.mxu0 0
    %96 = vmatprep.subr.bf16.mxu0 0
    %97 = vmatpush1.bf16.xpose.msra.mxu0 0
    %98 = vmatprep.subr.bf16.mxu0 0
    %99 = vmatpush1.bf16.xpose.msra.mxu0 0
    %100 = vmatprep.subr.bf16.mxu0 0
    %101 = vmatpush1.bf16.xpose.msra.mxu0 0
    %102 = vmatprep.subr.bf16.mxu0 0
    %103 = vmatpush1.bf16.xpose.msra.mxu0 0
    %104 = vmatprep.subr.bf16.mxu0 0
    %105 = vmatpush1.bf16.xpose.msra.mxu0 0
    %106 = vmatprep.subr.bf16.mxu0 0
    %107 = vmatpush1.bf16.xpose.msra.mxu0 0
    %108 = vmatprep.subr.bf16.mxu0 0
    %109 = vmatpush1.bf16.xpose.msra.mxu0 0
    %110 = vmatprep.subr.bf16.mxu0 0
    %111 = vmatpush1.bf16.xpose.msra.mxu0 0
    %112 = vmatprep.subr.bf16.mxu0 0
    %113 = vmatpush1.bf16.xpose.msra.mxu0 0
    %114 = vmatprep.subr.bf16.mxu0 0
    %115 = vmatpush1.bf16.xpose.msra.mxu0 0
    %116 = vmatprep.subr.bf16.mxu0 0
    %117 = vmatpush1.bf16.xpose.msra.mxu0 0
    %118 = vmatprep.mubr.bf16.mxu0 0
    %119 = vmatmul.mubr.bf16.gmra.mrb[0].mxu0 %v75
    %v120 = vpop.f32.mrb[0].mxu0
    %v121 = vadd.f32 %v46, %v120
    %v122 = vpop.f32.mrb[0].mxu0
    %v123 = vpop.f32.mrb[0].mxu0
    %v124 = vadd.f32 %v51, %v123
    %v125 = vpop.f32.mrb[0].mxu0
    %126 = vmatprep.mubr.bf16.mxu0 0
    %127 = vmatmul.mubr.bf16.gmra.mrb[0].mxu0 %v78
    %v128 = vpop.f32.mrb[0].mxu0
    %v129 = vadd.f32 %v56, %v128
    %v130 = vpop.f32.mrb[0].mxu0
    %v131 = vpop.f32.mrb[0].mxu0
    %v132 = vadd.f32 %v61, %v131
    %v133 = vpop.f32.mrb[0].mxu0
    %134 = vdwg.mxu0
    %v135 = vmax.f32 %v121, 0.0
    %v136 = vmax.f32 %v124, 0.0
    %v137 = vmax.f32 %v129, 0.0
    %v138 = vmax.f32 %v132, 0.0
    %v139 = vpack.c.bf16 %v136, %v135
    %v140 = vpack.c.bf16 %v138, %v137
    %v141 = vld [vmem:[%s3] sm:$0xf]
    %v142 = vld [vmem:[%s3 + $0x4] sm:$0xf]
    %v143 = vld [vmem:[%s3 + $0x8] sm:$0xf]
    %v144 = vld [vmem:[%s3 + $0xc] sm:$0xf]
    %v145 = vld [vmem:[%s4] sm:$0xff]
    %v146 = vld [vmem:[%s4 + $0x8] sm:$0xff]
    %v147 = vld [vmem:[%s4 + $0x10] sm:$0xff]
    %v148 = vld [vmem:[%s4 + $0x18] sm:$0xff]
    %150 = vset.pattern.permute.xlu0 0
    %151 = vperm.xlu0 %150, %v145
    %v152 = vpop.permute.xlu0 %151
    %155 = vset.pattern.permute.xlu0 0
    %156 = vperm.xlu0 %155, %v146
    %v157 = vpop.permute.xlu0 %156
    %160 = vset.pattern.permute.xlu0 0
    %161 = vperm.xlu0 %160, %v147
    %v162 = vpop.permute.xlu0 %161
    %165 = vset.pattern.permute.xlu0 0
    %166 = vperm.xlu0 %165, %v148
    %v167 = vpop.permute.xlu0 %166
    %v173 = vunpack.c.l.b16 %v141
    %v174 = vunpack.c.l.b16 %v142
    %v175 = vunpack.c.l.b16 %v143
    %v176 = vunpack.c.l.b16 %v144
    %v177 = vpack.c.b16 %v174, %v173
    %v178 = vpack.c.b16 %v176, %v175
    %v180 = vsel %vm73, %v177, 0
    %v183 = vsel %vm73, %v178, 0
    %185 = vmatprep.subr.bf16.mxu0 0
    %186 = vmatpush1.bf16.msra.mxu0 %v139
    %187 = vmatprep.subr.bf16.mxu0 0
    %188 = vmatpush1.bf16.msra.mxu0 %v140
    %189 = vmatprep.subr.bf16.mxu0 0
    %190 = vmatpush1.bf16.msra.mxu0 0
    %191 = vmatprep.subr.bf16.mxu0 0
    %192 = vmatpush1.bf16.msra.mxu0 0
    %193 = vmatprep.subr.bf16.mxu0 0
    %194 = vmatpush1.bf16.msra.mxu0 0
    %195 = vmatprep.subr.bf16.mxu0 0
    %196 = vmatpush1.bf16.msra.mxu0 0
    %197 = vmatprep.subr.bf16.mxu0 0
    %198 = vmatpush1.bf16.msra.mxu0 0
    %199 = vmatprep.subr.bf16.mxu0 0
    %200 = vmatpush1.bf16.msra.mxu0 0
    %201 = vmatprep.subr.bf16.mxu0 0
    %202 = vmatpush1.bf16.msra.mxu0 0
    %203 = vmatprep.subr.bf16.mxu0 0
    %204 = vmatpush1.bf16.msra.mxu0 0
    %205 = vmatprep.subr.bf16.mxu0 0
    %206 = vmatpush1.bf16.msra.mxu0 0
    %207 = vmatprep.subr.bf16.mxu0 0
    %208 = vmatpush1.bf16.msra.mxu0 0
    %209 = vmatprep.subr.bf16.mxu0 0
    %210 = vmatpush1.bf16.msra.mxu0 0
    %211 = vmatprep.subr.bf16.mxu0 0
    %212 = vmatpush1.bf16.msra.mxu0 0
    %213 = vmatprep.subr.bf16.mxu0 0
    %214 = vmatpush1.bf16.msra.mxu0 0
    %215 = vmatprep.subr.bf16.mxu0 0
    %216 = vmatpush1.bf16.msra.mxu0 0
    %217 = vmatprep.mubr.bf16.mxu0 0
    %218 = vmatmul.mubr.bf16.gmra.mrb[0].mxu0 %v180
    %v219 = vpop.f32.mrb[0].mxu0
    %v220 = vadd.f32 %v152, %v219
    %v221 = vpop.f32.mrb[0].mxu0
    %v222 = vpop.f32.mrb[0].mxu0
    %v223 = vadd.f32 %v157, %v222
    %v224 = vpop.f32.mrb[0].mxu0
    %225 = vmatprep.mubr.bf16.mxu0 0
    %226 = vmatmul.mubr.bf16.gmra.mrb[0].mxu0 %v183
    %v227 = vpop.f32.mrb[0].mxu0
    %v228 = vadd.f32 %v162, %v227
    %v229 = vpop.f32.mrb[0].mxu0
    %v230 = vpop.f32.mrb[0].mxu0
    %v231 = vadd.f32 %v167, %v230
    %v232 = vpop.f32.mrb[0].mxu0
    %233 = vdwg.mxu0
    %v234 = vmax.f32 %v220, 0.0
    %v235 = vmax.f32 %v223, 0.0
    %v236 = vmax.f32 %v228, 0.0
    %v237 = vmax.f32 %v231, 0.0
    %v238 = vpack.c.bf16 %v235, %v234
    %v239 = vpack.c.bf16 %v237, %v236
    %v240 = vld [vmem:[%s5] sm:$0xff]
    %v241 = vld [vmem:[%s5 + $0x8] sm:$0xff]
    %v242 = vld [vmem:[%s5 + $0x10] sm:$0xff]
    %v243 = vld [vmem:[%s5 + $0x18] sm:$0xff]
    %v244 = vld [vmem:[#allocation2] sm:$0x1]
    %v245 = vunpack.c.l.bf16 %v238
    %v246 = vunpack.c.h.bf16 %v238
    %v247 = vunpack.c.l.bf16 %v239
    %v248 = vunpack.c.h.bf16 %v239
    %250 = vset.pattern.permute.xlu0 0
    %251 = vperm.xlu0 %250, %v240
    %v252 = vpop.permute.xlu0 %251
    %255 = vset.pattern.permute.xlu0 0
    %256 = vperm.xlu0 %255, %v241
    %v257 = vpop.permute.xlu0 %256
    %260 = vset.pattern.permute.xlu0 0
    %261 = vperm.xlu0 %260, %v242
    %v262 = vpop.permute.xlu0 %261
    %265 = vset.pattern.permute.xlu0 0
    %266 = vperm.xlu0 %265, %v243
    %v267 = vpop.permute.xlu0 %266
    %v269 = vmul.f32 %v245, %v252
    %v270 = vmul.f32 %v246, %v257
    %v271 = vmul.f32 %v247, %v262
    %v272 = vmul.f32 %v248, %v267
    %vm273 = vcmask 195584
    %v274 = vsel %vm273, %v269, 0.0
    %v275 = vsel %vm273, %v270, 0.0
    %v276 = vadd.f32 %v274, %v275
    %v277 = vsel %vm273, %v271, 0.0
    %v278 = vadd.f32 %v276, %v277
    %v279 = vsel %vm273, %v272, 0.0
    %v280 = vadd.f32 %v278, %v279
    %v281 = vrot.slane %v280, 4
    %v282 = vadd.f32 %v280, %v281
    %v283 = vrot.slane %v282, 2
    %v284 = vadd.f32 %v282, %v283
    %v285 = vrot.slane %v284, 1
    %v286 = vadd.f32 %v284, %v285
    %288 = vset.pattern.permute.xlu0 0
    %289 = vperm.xlu0 %288, %v244
    %v290 = vpop.permute.xlu0 %289
    %v292 = vlaneseq
    %v293 = vshrl.u32 %v292, 7
    %v294 = vsub.s32 0, %v293
    %v295 = vrot.slane %v290, %v294
    %v296 = vadd.f32 %v286, %v295
    %v297 = vsub.f32 0.0, %v296
    %v298 = vmul.f32 %v297, 1.442695
    %v299 = vpow.pop %v298
    %v300 = vadd.f32 %v299, 1.0
    %v301 = vrcp.pop %v300
    %vm302 = vcmask 188416
    %303 = vst.msk [vmem:[#allocation3] sm:$0x1] %vm302, %v301
    // Predicated region
    $region30: #{tpu_custom_call.1} parent=1 // pred_check
      _
    $region31: #{tpu_custom_call.1} parent=1 // pred_check_branch
      %305 = sbr.rel (0) target = $region33
    $region32: #{tpu_custom_call.1} parent=1 // pred_region
      %s307 = ssub.s32 16, 16
      %308 = vsyncadd [#allocation4], %s307
      %s310 = sshll.u32 [#allocation3], 4
      %s311 = int_to_ptr.vmem [resolvable:$true] %s310
      %313 = dma.vmem_to_hbm [thread:$0]  %s311, 16, %s7, [#allocation4]
    $region33: #{tpu_custom_call.1} parent=1 // pred_fallthru
      _
    // Predicated region
    $region34: #{tpu_custom_call.1} parent=1 // pred_check
      _
    $region35: #{tpu_custom_call.1} parent=1 // pred_check_branch
      %315 = sbr.rel (0) target = $region37
    $region36: #{tpu_custom_call.1} parent=1 // pred_region
      %316 = dma.done [#allocation4], 16
    $region37: #{tpu_custom_call.1} parent=1 // pred_fallthru
      _
    %317 = vsyncpa [#allocation4], 1

// kernel: tpu_custom_call.1
$region0: #{tpu_custom_call.1}
  #allocation0 [shape = 'u32[]', space=smem, size = 0x4, offset = 0x4, fixed_abs, tag = 'smem constant byte address 0x4 - core index']
  #allocation1 [shape = 'u32[144,128]{1,0:T(1,128)}', space=vmem, size = 0x12000, scoped, tag = 'internal scratch']
  #allocation2 [shape = 'f32[1,1]{1,0:T(1,128)S(1)}', space=vmem, size = 0x200, scoped, tag = 'scoped memory for tpu_custom_call.1']
  %s0 = inlined_call_operand.vmem [shape: f32[20,32], index: 0, kind: input, shape index: {}]
  %s1 = inlined_call_operand.vmem [shape: bf16[32,32], index: 1, kind: input, shape index: {}]
  %s2 = inlined_call_operand.vmem [shape: f32[32,1], index: 2, kind: input, shape index: {}]
  %s3 = inlined_call_operand.vmem [shape: bf16[32,32], index: 3, kind: input, shape index: {}]
  %s4 = inlined_call_operand.vmem [shape: f32[32,1], index: 4, kind: input, shape index: {}]
  %s5 = inlined_call_operand.vmem [shape: f32[32,1], index: 5, kind: input, shape index: {}]
  %s6 = inlined_call_operand.<no memory space> [shape: f32[1,1], index: 6, kind: input, shape index: {}]
  %s7 = inlined_call_operand.hbm [shape: f32[1,24], index: 7, kind: output, shape index: {}]
  %s8 = sld [smem:[#allocation0]]
  $region38: #{tpu_custom_call.1} parent=0
    _
  %s10 = ssub.s32 1, %s8
  %s11 = scalar_select 0, %s10, %s8
  %v12 = vstv %s6
  %13 = vst [vmem:[#allocation2] sm:$0x1] %v12
  $region1: #{tpu_custom_call.1} parent=0
    #allocation3 [shape = 'u8[512]{0}', space=vmem, size = 0x400, scoped, tag = 'output window, operand 0, single buffered']
    #allocation4 [shape = 's32[1]{0}', space=sflag, size = 0x4, scoped, tag = 'scoped memory for tpu_custom_call.1']
    %14 = vsyncpa [#allocation4], 0
    // Predicated region
    $region2: #{tpu_custom_call.1} parent=1 // pred_check
      _
    $region3: #{tpu_custom_call.1} parent=1 // pred_check_branch
      %16 = sbr.rel (0) target = $region5
    $region4: #{tpu_custom_call.1} parent=1 // pred_region
      _
    $region5: #{tpu_custom_call.1} parent=1 // pred_fallthru
      _
    // Predicated region
    $region6: #{tpu_custom_call.1} parent=1 // pred_check
      _
    $region7: #{tpu_custom_call.1} parent=1 // pred_check_branch
      %18 = sbr.rel (0) target = $region9
    $region8: #{tpu_custom_call.1} parent=1 // pred_region
      _
    $region9: #{tpu_custom_call.1} parent=1 // pred_fallthru
      _
    // Predicated region
    $region10: #{tpu_custom_call.1} parent=1 // pred_check
      _
    $region11: #{tpu_custom_call.1} parent=1 // pred_check_branch
      %20 = sbr.rel (0) target = $region13
    $region12: #{tpu_custom_call.1} parent=1 // pred_region
      _
    $region13: #{tpu_custom_call.1} parent=1 // pred_fallthru
      _
    // Predicated region
    $region14: #{tpu_custom_call.1} parent=1 // pred_check
      _
    $region15: #{tpu_custom_call.1} parent=1 // pred_check_branch
      %22 = sbr.rel (0) target = $region17
    $region16: #{tpu_custom_call.1} parent=1 // pred_region
      _
    $region17: #{tpu_custom_call.1} parent=1 // pred_fallthru
      _
    // Predicated region
    $region18: #{tpu_custom_call.1} parent=1 // pred_check
      _
    $region19: #{tpu_custom_call.1} parent=1 // pred_check_branch
      %24 = sbr.rel (0) target = $region21
    $region20: #{tpu_custom_call.1} parent=1 // pred_region
      _
    $region21: #{tpu_custom_call.1} parent=1 // pred_fallthru
      _
    // Predicated region
    $region22: #{tpu_custom_call.1} parent=1 // pred_check
      _
    $region23: #{tpu_custom_call.1} parent=1 // pred_check_branch
      %26 = sbr.rel (0) target = $region25
    $region24: #{tpu_custom_call.1} parent=1 // pred_region
      _
    $region25: #{tpu_custom_call.1} parent=1 // pred_fallthru
      _
    // Predicated region
    $region26: #{tpu_custom_call.1} parent=1 // pred_check
      _
    $region27: #{tpu_custom_call.1} parent=1 // pred_check_branch
      %28 = sbr.rel (0) target = $region29
    $region28: #{tpu_custom_call.1} parent=1 // pred_region
      _
    $region29: #{tpu_custom_call.1} parent=1 // pred_fallthru
      _
    %v30 = vld [vmem:[%s0] sm:$0xff]
    %v31 = vld [vmem:[%s0 + $0x8] sm:$0xff]
    %v32 = vld [vmem:[%s0 + $0x10] sm:$0xff]
    %v33 = vpack.c.bf16 %v31, %v30
    %v34 = vpack.c.bf16 %v32, %v32
    %v35 = vld [vmem:[%s1] sm:$0xf]
    %v36 = vld [vmem:[%s1 + $0x4] sm:$0xf]
    %v37 = vld [vmem:[%s1 + $0x8] sm:$0xf]
    %v38 = vld [vmem:[%s1 + $0xc] sm:$0xf]
    %v39 = vld [vmem:[%s2] sm:$0xff]
    %v40 = vld [vmem:[%s2 + $0x8] sm:$0xff]
    %v41 = vld [vmem:[%s2 + $0x10] sm:$0xff]
    %v42 = vld [vmem:[%s2 + $0x18] sm:$0xff]
    %44 = vset.pattern.permute.xlu0 0
    %45 = vperm.xlu0 %44, %v39
    %v46 = vpop.permute.xlu0 %45
    %49 = vset.pattern.permute.xlu0 0
    %50 = vperm.xlu0 %49, %v40
    %v51 = vpop.permute.xlu0 %50
    %54 = vset.pattern.permute.xlu0 0
    %55 = vperm.xlu0 %54, %v41
    %v56 = vpop.permute.xlu0 %55
    %59 = vset.pattern.permute.xlu0 0
    %60 = vperm.xlu0 %59, %v42
    %v61 = vpop.permute.xlu0 %60
    %v67 = vunpack.c.l.b16 %v35
    %v68 = vunpack.c.l.b16 %v36
    %v69 = vunpack.c.l.b16 %v37
    %v70 = vunpack.c.l.b16 %v38
    %v71 = vpack.c.b16 %v68, %v67
    %v72 = vpack.c.b16 %v70, %v69
    %vm73 = vcmask 261120
    %v75 = vsel %vm73, %v71, 0
    %v78 = vsel %vm73, %v72, 0
    %v81 = vsel %vm73, %v33, 0
    %v84 = vsel %vm73, %v34, 0
    %86 = vmatprep.subr.bf16.mxu0 0
    %87 = vmatpush1.bf16.xpose.msra.mxu0 %v81
    %88 = vmatprep.subr.bf16.mxu0 0
    %89 = vmatpush1.bf16.xpose.msra.mxu0 %v84
    %90 = vmatprep.subr.bf16.mxu0 0
    %91 = vmatpush1.bf16.xpose.msra.mxu0 0
    %92 = vmatprep.subr.bf16.mxu0 0
    %93 = vmatpush1.bf16.xpose.msra.mxu0 0
    %94 = vmatprep.subr.bf16.mxu0 0
    %95 = vmatpush1.bf16.xpose.msra.mxu0 0
    %96 = vmatprep.subr.bf16.mxu0 0
    %97 = vmatpush1.bf16.xpose.msra.mxu0 0
    %98 = vmatprep.subr.bf16.mxu0 0
    %99 = vmatpush1.bf16.xpose.msra.mxu0 0
    %100 = vmatprep.subr.bf16.mxu0 0
    %101 = vmatpush1.bf16.xpose.msra.mxu0 0
    %102 = vmatprep.subr.bf16.mxu0 0
    %103 = vmatpush1.bf16.xpose.msra.mxu0 0
    %104 = vmatprep.subr.bf16.mxu0 0
    %105 = vmatpush1.bf16.xpose.msra.mxu0 0
    %106 = vmatprep.subr.bf16.mxu0 0
    %107 = vmatpush1.bf16.xpose.msra.mxu0 0
    %108 = vmatprep.subr.bf16.mxu0 0
    %109 = vmatpush1.bf16.xpose.msra.mxu0 0
    %110 = vmatprep.subr.bf16.mxu0 0
    %111 = vmatpush1.bf16.xpose.msra.mxu0 0
    %112 = vmatprep.subr.bf16.mxu0 0
    %113 = vmatpush1.bf16.xpose.msra.mxu0 0
    %114 = vmatprep.subr.bf16.mxu0 0
    %115 = vmatpush1.bf16.xpose.msra.mxu0 0
    %116 = vmatprep.subr.bf16.mxu0 0
    %117 = vmatpush1.bf16.xpose.msra.mxu0 0
    %118 = vmatprep.mubr.bf16.mxu0 0
    %119 = vmatmul.mubr.bf16.gmra.mrb[0].mxu0 %v75
    %v120 = vpop.f32.mrb[0].mxu0
    %v121 = vadd.f32 %v46, %v120
    %v122 = vpop.f32.mrb[0].mxu0
    %v123 = vpop.f32.mrb[0].mxu0
    %v124 = vadd.f32 %v51, %v123
    %v125 = vpop.f32.mrb[0].mxu0
    %126 = vmatprep.mubr.bf16.mxu0 0
    %127 = vmatmul.mubr.bf16.gmra.mrb[0].mxu0 %v78
    %v128 = vpop.f32.mrb[0].mxu0
    %v129 = vadd.f32 %v56, %v128
    %v130 = vpop.f32.mrb[0].mxu0
    %v131 = vpop.f32.mrb[0].mxu0
    %v132 = vadd.f32 %v61, %v131
    %v133 = vpop.f32.mrb[0].mxu0
    %134 = vdwg.mxu0
    %v135 = vmax.f32 %v121, 0.0
    %v136 = vmax.f32 %v124, 0.0
    %v137 = vmax.f32 %v129, 0.0
    %v138 = vmax.f32 %v132, 0.0
    %v139 = vpack.c.bf16 %v136, %v135
    %v140 = vpack.c.bf16 %v138, %v137
    %v141 = vld [vmem:[%s3] sm:$0xf]
    %v142 = vld [vmem:[%s3 + $0x4] sm:$0xf]
    %v143 = vld [vmem:[%s3 + $0x8] sm:$0xf]
    %v144 = vld [vmem:[%s3 + $0xc] sm:$0xf]
    %v145 = vld [vmem:[%s4] sm:$0xff]
    %v146 = vld [vmem:[%s4 + $0x8] sm:$0xff]
    %v147 = vld [vmem:[%s4 + $0x10] sm:$0xff]
    %v148 = vld [vmem:[%s4 + $0x18] sm:$0xff]
    %150 = vset.pattern.permute.xlu0 0
    %151 = vperm.xlu0 %150, %v145
    %v152 = vpop.permute.xlu0 %151
    %155 = vset.pattern.permute.xlu0 0
    %156 = vperm.xlu0 %155, %v146
    %v157 = vpop.permute.xlu0 %156
    %160 = vset.pattern.permute.xlu0 0
    %161 = vperm.xlu0 %160, %v147
    %v162 = vpop.permute.xlu0 %161
    %165 = vset.pattern.permute.xlu0 0
    %166 = vperm.xlu0 %165, %v148
    %v167 = vpop.permute.xlu0 %166
    %v173 = vunpack.c.l.b16 %v141
    %v174 = vunpack.c.l.b16 %v142
    %v175 = vunpack.c.l.b16 %v143
    %v176 = vunpack.c.l.b16 %v144
    %v177 = vpack.c.b16 %v174, %v173
    %v178 = vpack.c.b16 %v176, %v175
    %v180 = vsel %vm73, %v177, 0
    %v183 = vsel %vm73, %v178, 0
    %185 = vmatprep.subr.bf16.mxu0 0
    %186 = vmatpush1.bf16.msra.mxu0 %v139
    %187 = vmatprep.subr.bf16.mxu0 0
    %188 = vmatpush1.bf16.msra.mxu0 %v140
    %189 = vmatprep.subr.bf16.mxu0 0
    %190 = vmatpush1.bf16.msra.mxu0 0
    %191 = vmatprep.subr.bf16.mxu0 0
    %192 = vmatpush1.bf16.msra.mxu0 0
    %193 = vmatprep.subr.bf16.mxu0 0
    %194 = vmatpush1.bf16.msra.mxu0 0
    %195 = vmatprep.subr.bf16.mxu0 0
    %196 = vmatpush1.bf16.msra.mxu0 0
    %197 = vmatprep.subr.bf16.mxu0 0
    %198 = vmatpush1.bf16.msra.mxu0 0
    %199 = vmatprep.subr.bf16.mxu0 0
    %200 = vmatpush1.bf16.msra.mxu0 0
    %201 = vmatprep.subr.bf16.mxu0 0
    %202 = vmatpush1.bf16.msra.mxu0 0
    %203 = vmatprep.subr.bf16.mxu0 0
    %204 = vmatpush1.bf16.msra.mxu0 0
    %205 = vmatprep.subr.bf16.mxu0 0
    %206 = vmatpush1.bf16.msra.mxu0 0
    %207 = vmatprep.subr.bf16.mxu0 0
    %208 = vmatpush1.bf16.msra.mxu0 0
    %209 = vmatprep.subr.bf16.mxu0 0
    %210 = vmatpush1.bf16.msra.mxu0 0
    %211 = vmatprep.subr.bf16.mxu0 0
    %212 = vmatpush1.bf16.msra.mxu0 0
    %213 = vmatprep.subr.bf16.mxu0 0
    %214 = vmatpush1.bf16.msra.mxu0 0
    %215 = vmatprep.subr.bf16.mxu0 0
    %216 = vmatpush1.bf16.msra.mxu0 0
    %217 = vmatprep.mubr.bf16.mxu0 0
    %218 = vmatmul.mubr.bf16.gmra.mrb[0].mxu0 %v180
    %v219 = vpop.f32.mrb[0].mxu0
    %v220 = vadd.f32 %v152, %v219
    %v221 = vpop.f32.mrb[0].mxu0
    %v222 = vpop.f32.mrb[0].mxu0
    %v223 = vadd.f32 %v157, %v222
    %v224 = vpop.f32.mrb[0].mxu0
    %225 = vmatprep.mubr.bf16.mxu0 0
    %226 = vmatmul.mubr.bf16.gmra.mrb[0].mxu0 %v183
    %v227 = vpop.f32.mrb[0].mxu0
    %v228 = vadd.f32 %v162, %v227
    %v229 = vpop.f32.mrb[0].mxu0
    %v230 = vpop.f32.mrb[0].mxu0
    %v231 = vadd.f32 %v167, %v230
    %v232 = vpop.f32.mrb[0].mxu0
    %233 = vdwg.mxu0
    %v234 = vmax.f32 %v220, 0.0
    %v235 = vmax.f32 %v223, 0.0
    %v236 = vmax.f32 %v228, 0.0
    %v237 = vmax.f32 %v231, 0.0
    %v238 = vpack.c.bf16 %v235, %v234
    %v239 = vpack.c.bf16 %v237, %v236
    %v240 = vld [vmem:[%s5] sm:$0xff]
    %v241 = vld [vmem:[%s5 + $0x8] sm:$0xff]
    %v242 = vld [vmem:[%s5 + $0x10] sm:$0xff]
    %v243 = vld [vmem:[%s5 + $0x18] sm:$0xff]
    %v244 = vld [vmem:[#allocation2] sm:$0x1]
    %v245 = vunpack.c.l.bf16 %v238
    %v246 = vunpack.c.h.bf16 %v238
    %v247 = vunpack.c.l.bf16 %v239
    %v248 = vunpack.c.h.bf16 %v239
    %250 = vset.pattern.permute.xlu0 0
    %251 = vperm.xlu0 %250, %v240
    %v252 = vpop.permute.xlu0 %251
    %255 = vset.pattern.permute.xlu0 0
    %256 = vperm.xlu0 %255, %v241
    %v257 = vpop.permute.xlu0 %256
    %260 = vset.pattern.permute.xlu0 0
    %261 = vperm.xlu0 %260, %v242
    %v262 = vpop.permute.xlu0 %261
    %265 = vset.pattern.permute.xlu0 0
    %266 = vperm.xlu0 %265, %v243
    %v267 = vpop.permute.xlu0 %266
    %v269 = vmul.f32 %v245, %v252
    %v270 = vmul.f32 %v246, %v257
    %v271 = vmul.f32 %v247, %v262
    %v272 = vmul.f32 %v248, %v267
    %vm273 = vcmask 195584
    %v274 = vsel %vm273, %v269, 0.0
    %v275 = vsel %vm273, %v270, 0.0
    %v276 = vadd.f32 %v274, %v275
    %v277 = vsel %vm273, %v271, 0.0
    %v278 = vadd.f32 %v276, %v277
    %v279 = vsel %vm273, %v272, 0.0
    %v280 = vadd.f32 %v278, %v279
    %v281 = vrot.slane %v280, 4
    %v282 = vadd.f32 %v280, %v281
    %v283 = vrot.slane %v282, 2
    %v284 = vadd.f32 %v282, %v283
    %v285 = vrot.slane %v284, 1
    %v286 = vadd.f32 %v284, %v285
    %288 = vset.pattern.permute.xlu0 0
    %289 = vperm.xlu0 %288, %v244
    %v290 = vpop.permute.xlu0 %289
    %v292 = vlaneseq
    %v293 = vshrl.u32 %v292, 7
    %v294 = vsub.s32 0, %v293
    %v295 = vrot.slane %v290, %v294
    %v296 = vadd.f32 %v286, %v295
    %v297 = vsub.f32 0.0, %v296
    %v298 = vmul.f32 %v297, 1.442695
    %v299 = vpow.pop %v298
    %v300 = vadd.f32 %v299, 1.0
    %v301 = vrcp.pop %v300
    %vm302 = vcmask 188416
    %303 = vst.msk [vmem:[#allocation3] sm:$0x1] %vm302, %v301
    // Predicated region
    $region30: #{tpu_custom_call.1} parent=1 // pred_check
      _
    $region31: #{tpu_custom_call.1} parent=1 // pred_check_branch
      %305 = sbr.rel (0) target = $region33
    $region32: #{tpu_custom_call.1} parent=1 // pred_region
      %s307 = ssub.s32 16, 16
      %308 = vsyncadd [#allocation4], %s307
      %s310 = sshll.u32 [#allocation3], 4
      %s311 = int_to_ptr.vmem [resolvable:$true] %s310
      %313 = dma.vmem_to_hbm [thread:$0]  %s311, 16, %s7, [#allocation4]
    $region33: #{tpu_custom_call.1} parent=1 // pred_fallthru
      _
    // Predicated region
    $region34: #{tpu_custom_call.1} parent=1 // pred_check
      _
    $region35: #{tpu_custom_call.1} parent=1 // pred_check_branch
      %315 = sbr.rel (0) target = $region37
    $region36: #{tpu_custom_call.1} parent=1 // pred_region
      %316 = dma.done [#allocation4], 16
    $region37: #{tpu_custom_call.1} parent=1 // pred_fallthru
      _
    %317 = vsyncpa [#allocation4], 1

</llo_original>
